<compile_context>
chip_gen: v7x
topology: tpu7x:2x2x1
jax: 0.10.0
libtpu: 0.0.40
codegen_flags: <defaults>
</compile_context>

<pallas_src>
import functools

import jax
import jax.numpy as jnp
from jax.experimental import pallas as pl
from jax.experimental.pallas import tpu as pltpu


def altnet_kernel(x_ref, y_ref, w1x_ref, w1y_ref, b1_ref, w2_ref, b2_ref,
                  w3_ref, b3_ref, w4t_ref, b4_ref, out_ref):
    """One batch tile: (TB, x_dim) + (TB, y_dim) -> (1, TB) scores (lane-dense)."""
    cdt = jnp.bfloat16  # MXU operand dtype; weights arrive pre-cast to bf16.

    x = x_ref[...].astype(cdt)
    y = y_ref[...].astype(cdt)

    # Layer 1 with the concat fused into the matmul:
    #   concat([x, y], 1) @ W1 == x @ W1[:x_dim] + y @ W1[x_dim:]
    h = (jnp.dot(x, w1x_ref[...], preferred_element_type=jnp.float32)
         + jnp.dot(y, w1y_ref[...], preferred_element_type=jnp.float32)
         + b1_ref[...])
    h = jnp.maximum(h, 0.0)

    # Layer 2: h + relu(h @ W2 + b2)
    h2 = jnp.dot(h.astype(cdt), w2_ref[...],
                 preferred_element_type=jnp.float32) + b2_ref[...]
    h = h + jnp.maximum(h2, 0.0)

    # Layer 3: h + relu(h @ W3 + b3)
    h3 = jnp.dot(h.astype(cdt), w3_ref[...],
                 preferred_element_type=jnp.float32) + b3_ref[...]
    h = h + jnp.maximum(h3, 0.0)

    # Layer 4: W4^T (1, Hp) contracted with h (TB, Hp) over Hp -> (1, TB).
    # The batch lands on the 128-lane axis, so the output store is lane-dense.
    z = jax.lax.dot_general(
        w4t_ref[...], h.astype(cdt),
        dimension_numbers=(((1,), (1,)), ((), ())),
        preferred_element_type=jnp.float32)
    out_ref[...] = (z + b4_ref[...]).astype(out_ref.dtype)


def _pad_axis(a, axis, new_size):
    pad = [(0, 0)] * a.ndim
    pad[axis] = (0, new_size - a.shape[axis])
    return jnp.pad(a, pad)


@functools.partial(jax.jit, static_argnames=("tb",))
def altnet_forward(x, y, params, *, tb=256):
    """x: (B, x_dim), y: (B, y_dim). Returns (B, 1) float32."""
    w1, b1, w2, b2, w3, b3, w4, b4 = params
    B, x_dim = x.shape
    y_dim = y.shape[1]
    H = w1.shape[1]
    assert tb % 128 == 0, "batch tile must be a multiple of the 128-lane width"

    # Pad the hidden width to the 128-lane vreg width (exact: zero-padded
    # columns stay zero through relu/residual, W4's padded rows are zero).
    Hp = ((H + 127) // 128) * 128
    cdt = jnp.bfloat16

    w1p = _pad_axis(w1, 1, Hp).astype(cdt)
    w1x, w1y = w1p[:x_dim], w1p[x_dim:]          # concat fused via split W1
    b1p = _pad_axis(b1.reshape(1, H), 1, Hp).astype(jnp.float32)
    w2p = _pad_axis(_pad_axis(w2, 0, Hp), 1, Hp).astype(cdt)
    b2p = _pad_axis(b2.reshape(1, H), 1, Hp).astype(jnp.float32)
    w3p = _pad_axis(_pad_axis(w3, 0, Hp), 1, Hp).astype(cdt)
    b3p = _pad_axis(b3.reshape(1, H), 1, Hp).astype(jnp.float32)
    w4t = _pad_axis(w4.reshape(1, H), 1, Hp).astype(cdt)   # (1, Hp) row
    b4r = b4.reshape(1, 1).astype(jnp.float32)

    num_tiles = pl.cdiv(B, tb)
    b_pad = num_tiles * tb
    if b_pad != B:  # pad ragged batch with zero rows; sliced off below
        x = jnp.pad(x, ((0, b_pad - B), (0, 0)))
        y = jnp.pad(y, ((0, b_pad - B), (0, 0)))

    def resident(shape):
        # Full-shape block, constant block index -> stays in VMEM, no re-DMA.
        return pl.BlockSpec(shape, lambda i: (0, 0))

    out = pl.pallas_call(
        altnet_kernel,
        out_shape=jax.ShapeDtypeStruct((1, b_pad), jnp.float32),
        grid=(num_tiles,),
        in_specs=[
            pl.BlockSpec((tb, x_dim), lambda i: (i, 0)),   # batch-tiled, pipelined
            pl.BlockSpec((tb, y_dim), lambda i: (i, 0)),
            resident((x_dim, Hp)),   # W1[:x_dim]   (bf16)
            resident((y_dim, Hp)),   # W1[x_dim:]   (bf16)
            resident((1, Hp)),       # b1           (f32)
            resident((Hp, Hp)),      # W2           (bf16)
            resident((1, Hp)),       # b2           (f32)
            resident((Hp, Hp)),      # W3           (bf16)
            resident((1, Hp)),       # b3           (f32)
            resident((1, Hp)),       # W4^T         (bf16)
            resident((1, 1)),        # b4           (f32)
        ],
        out_specs=pl.BlockSpec((1, tb), lambda i: (0, i)),
        compiler_params=pltpu.CompilerParams(
            dimension_semantics=("parallel",),           # megacore-shard on v7x
            vmem_limit_bytes=32 * 1024 * 1024,
        ),
    )(x, y, w1x, w1y, b1p, w2p, b2p, w3p, b3p, w4t, b4r)

    return out[0, :B].reshape(B, 1)


def init_params(key, x_dim, y_dim, H):
    """nn.Linear-style uniform(-1/sqrt(fan_in), 1/sqrt(fan_in)); weights stored (in, out)."""
    dims = [(x_dim + y_dim, H), (H, H), (H, H), (H, 1)]
    params = []
    for fan_in, fan_out in dims:
        key, kw, kb = jax.random.split(key, 3)
        bound = 1.0 / jnp.sqrt(float(fan_in))
        w = jax.random.uniform(kw, (fan_in, fan_out), jnp.float32, -bound, bound)
        b = jax.random.uniform(kb, (1, fan_out), jnp.float32, -bound, bound)
        params += [w, b]
    return tuple(params)


def altnet_reference(x, y, params):
    """Pure-JAX f32 reference for correctness checking."""
    w1, b1, w2, b2, w3, b3, w4, b4 = params
    xy = jnp.concatenate([x, y], axis=1)
    h = jax.nn.relu(xy @ w1 + b1)
    h = h + jax.nn.relu(h @ w2 + b2)
    h = h + jax.nn.relu(h @ w3 + b3)
    return h @ w4 + b4


if __name__ == "__main__":
    key = jax.random.PRNGKey(0)
    kx, ky, kp = jax.random.split(key, 3)

    # Small demo shapes: module default H=100 (padded to 128 internally),
    # 4 batch tiles of 128 rows.
    B, x_dim, y_dim, H = 512, 16, 16, 100

    x = jax.random.normal(kx, (B, x_dim), jnp.float32)
    y = jax.random.normal(ky, (B, y_dim), jnp.float32)
    params = init_params(kp, x_dim, y_dim, H)

    out = altnet_forward(x, y, params, tb=128)
    out = jax.block_until_ready(out)

    ref = altnet_reference(x, y, params)
    assert out.shape == (B, 1)
    # bf16 MXU operands (f32 accumulation) -> loosened tolerance vs f32 reference.
    assert jnp.allclose(out, ref, atol=5e-2, rtol=5e-2), "mismatch vs reference"

    print("KERNEL_OK")
</pallas_src>

<mosaic_0001>
module attributes {stable_mosaic.version = 11 : i64} {
  func.func @altnet_kernel(%arg0: i32, %arg1: memref<128x16xf32, #tpu.memory_space<vmem>>, %arg2: memref<128x16xf32, #tpu.memory_space<vmem>>, %arg3: memref<16x128xbf16, #tpu.memory_space<vmem>>, %arg4: memref<16x128xbf16, #tpu.memory_space<vmem>>, %arg5: memref<1x128xf32, #tpu.memory_space<vmem>>, %arg6: memref<128x128xbf16, #tpu.memory_space<vmem>>, %arg7: memref<1x128xf32, #tpu.memory_space<vmem>>, %arg8: memref<128x128xbf16, #tpu.memory_space<vmem>>, %arg9: memref<1x128xf32, #tpu.memory_space<vmem>>, %arg10: memref<1x128xbf16, #tpu.memory_space<vmem>>, %arg11: memref<1x1xf32, #tpu.memory_space<vmem>>, %arg12: memref<1x128xf32, #tpu.memory_space<vmem>>) attributes {dimension_semantics = [#tpu.dimension_semantics<parallel>], iteration_bounds = array<i64: 4>, scalar_prefetch = 0 : i64, scratch_operands = 0 : i64, tpu.core_type = #tpu.core_type<tc>, window_params = [{transform_indices = @transform_0, window_bounds = array<i64: 128, 16>}, {transform_indices = @transform_1, window_bounds = array<i64: 128, 16>}, {pipeline_mode = #tpu.pipeline_mode<synchronous>, transform_indices = @transform_2, window_bounds = array<i64: 16, 128>}, {pipeline_mode = #tpu.pipeline_mode<synchronous>, transform_indices = @transform_3, window_bounds = array<i64: 16, 128>}, {pipeline_mode = #tpu.pipeline_mode<synchronous>, transform_indices = @transform_4, window_bounds = array<i64: 1, 128>}, {pipeline_mode = #tpu.pipeline_mode<synchronous>, transform_indices = @transform_5, window_bounds = array<i64: 128, 128>}, {pipeline_mode = #tpu.pipeline_mode<synchronous>, transform_indices = @transform_6, window_bounds = array<i64: 1, 128>}, {pipeline_mode = #tpu.pipeline_mode<synchronous>, transform_indices = @transform_7, window_bounds = array<i64: 128, 128>}, {pipeline_mode = #tpu.pipeline_mode<synchronous>, transform_indices = @transform_8, window_bounds = array<i64: 1, 128>}, {pipeline_mode = #tpu.pipeline_mode<synchronous>, transform_indices = @transform_9, window_bounds = array<i64: 1, 128>}, {pipeline_mode = #tpu.pipeline_mode<synchronous>, transform_indices = @transform_10, window_bounds = array<i64: 1, 1>}, {transform_indices = @transform_11, window_bounds = array<i64: 1, 128>}]} {
    %c0 = arith.constant 0 : index
    %c0_0 = arith.constant 0 : index
    %0 = vector.load %arg1[%c0, %c0_0] : memref<128x16xf32, #tpu.memory_space<vmem>>, vector<128x16xf32>
    %1 = arith.truncf %0 : vector<128x16xf32> to vector<128x16xbf16>
    %c0_1 = arith.constant 0 : index
    %c0_2 = arith.constant 0 : index
    %2 = vector.load %arg2[%c0_1, %c0_2] : memref<128x16xf32, #tpu.memory_space<vmem>>, vector<128x16xf32>
    %3 = arith.truncf %2 : vector<128x16xf32> to vector<128x16xbf16>
    %c0_3 = arith.constant 0 : index
    %c0_4 = arith.constant 0 : index
    %4 = vector.load %arg3[%c0_3, %c0_4] : memref<16x128xbf16, #tpu.memory_space<vmem>>, vector<16x128xbf16>
    %cst = arith.constant dense<0.000000e+00> : vector<128x128xf32>
    %5 = tpu.matmul %1, %4, %cst {dimension_numbers = #tpu.dot_dimension_numbers<[1], [0], [0], [1], [0, 0, 1, 1], [], []>} : vector<128x16xbf16>, vector<16x128xbf16>, vector<128x128xf32> -> vector<128x128xf32>
    %c0_5 = arith.constant 0 : index
    %c0_6 = arith.constant 0 : index
    %6 = vector.load %arg4[%c0_5, %c0_6] : memref<16x128xbf16, #tpu.memory_space<vmem>>, vector<16x128xbf16>
    %cst_7 = arith.constant dense<0.000000e+00> : vector<128x128xf32>
    %7 = tpu.matmul %3, %6, %cst_7 {dimension_numbers = #tpu.dot_dimension_numbers<[1], [0], [0], [1], [0, 0, 1, 1], [], []>} : vector<128x16xbf16>, vector<16x128xbf16>, vector<128x128xf32> -> vector<128x128xf32>
    %8 = arith.addf %5, %7 : vector<128x128xf32>
    %c0_8 = arith.constant 0 : index
    %c0_9 = arith.constant 0 : index
    %9 = vector.load %arg5[%c0_8, %c0_9] : memref<1x128xf32, #tpu.memory_space<vmem>>, vector<1x128xf32>
    %10 = vector.broadcast %9 : vector<1x128xf32> to vector<128x128xf32>
    %11 = arith.addf %8, %10 : vector<128x128xf32>
    %cst_10 = arith.constant 0.000000e+00 : f32
    %12 = vector.broadcast %cst_10 : f32 to vector<128x128xf32>
    %13 = arith.maximumf %11, %12 : vector<128x128xf32>
    %14 = arith.truncf %13 : vector<128x128xf32> to vector<128x128xbf16>
    %c0_11 = arith.constant 0 : index
    %c0_12 = arith.constant 0 : index
    %15 = vector.load %arg6[%c0_11, %c0_12] : memref<128x128xbf16, #tpu.memory_space<vmem>>, vector<128x128xbf16>
    %cst_13 = arith.constant dense<0.000000e+00> : vector<128x128xf32>
    %16 = tpu.matmul %14, %15, %cst_13 {dimension_numbers = #tpu.dot_dimension_numbers<[1], [0], [0], [1], [0, 0, 1, 1], [], []>} : vector<128x128xbf16>, vector<128x128xbf16>, vector<128x128xf32> -> vector<128x128xf32>
    %c0_14 = arith.constant 0 : index
    %c0_15 = arith.constant 0 : index
    %17 = vector.load %arg7[%c0_14, %c0_15] : memref<1x128xf32, #tpu.memory_space<vmem>>, vector<1x128xf32>
    %18 = vector.broadcast %17 : vector<1x128xf32> to vector<128x128xf32>
    %19 = arith.addf %16, %18 : vector<128x128xf32>
    %cst_16 = arith.constant 0.000000e+00 : f32
    %20 = vector.broadcast %cst_16 : f32 to vector<128x128xf32>
    %21 = arith.maximumf %19, %20 : vector<128x128xf32>
    %22 = arith.addf %13, %21 : vector<128x128xf32>
    %23 = arith.truncf %22 : vector<128x128xf32> to vector<128x128xbf16>
    %c0_17 = arith.constant 0 : index
    %c0_18 = arith.constant 0 : index
    %24 = vector.load %arg8[%c0_17, %c0_18] : memref<128x128xbf16, #tpu.memory_space<vmem>>, vector<128x128xbf16>
    %cst_19 = arith.constant dense<0.000000e+00> : vector<128x128xf32>
    %25 = tpu.matmul %23, %24, %cst_19 {dimension_numbers = #tpu.dot_dimension_numbers<[1], [0], [0], [1], [0, 0, 1, 1], [], []>} : vector<128x128xbf16>, vector<128x128xbf16>, vector<128x128xf32> -> vector<128x128xf32>
    %c0_20 = arith.constant 0 : index
    %c0_21 = arith.constant 0 : index
    %26 = vector.load %arg9[%c0_20, %c0_21] : memref<1x128xf32, #tpu.memory_space<vmem>>, vector<1x128xf32>
    %27 = vector.broadcast %26 : vector<1x128xf32> to vector<128x128xf32>
    %28 = arith.addf %25, %27 : vector<128x128xf32>
    %cst_22 = arith.constant 0.000000e+00 : f32
    %29 = vector.broadcast %cst_22 : f32 to vector<128x128xf32>
    %30 = arith.maximumf %28, %29 : vector<128x128xf32>
    %31 = arith.addf %22, %30 : vector<128x128xf32>
    %c0_23 = arith.constant 0 : index
    %c0_24 = arith.constant 0 : index
    %32 = vector.load %arg10[%c0_23, %c0_24] : memref<1x128xbf16, #tpu.memory_space<vmem>>, vector<1x128xbf16>
    %33 = arith.truncf %31 : vector<128x128xf32> to vector<128x128xbf16>
    %cst_25 = arith.constant dense<0.000000e+00> : vector<1x128xf32>
    %34 = tpu.matmul %32, %33, %cst_25 {dimension_numbers = #tpu.dot_dimension_numbers<[1], [1], [0], [0], [0, 0, 1, 0], [], []>} : vector<1x128xbf16>, vector<128x128xbf16>, vector<1x128xf32> -> vector<1x128xf32>
    %c0_26 = arith.constant 0 : index
    %c0_27 = arith.constant 0 : index
    %35 = vector.load %arg11[%c0_26, %c0_27] : memref<1x1xf32, #tpu.memory_space<vmem>>, vector<1x1xf32>
    %36 = vector.broadcast %35 : vector<1x1xf32> to vector<1x128xf32>
    %37 = arith.addf %34, %36 : vector<1x128xf32>
    %c0_28 = arith.constant 0 : index
    %c0_29 = arith.constant 0 : index
    %38 = vector.load %arg12[%c0_28, %c0_29] : memref<1x128xf32, #tpu.memory_space<vmem>>, vector<1x128xf32>
    tpu.vector_store %arg12[%c0_28, %c0_29], %37 {strides = array<i32>} : memref<1x128xf32, #tpu.memory_space<vmem>>, vector<1x128xf32>,
    return
  }
  func.func @transform_0(%arg0: i32) -> (i32, i32) {
    %c0_i32 = arith.constant 0 : i32
    %c0_i32_0 = arith.constant 0 : i32
    return %arg0, %c0_i32 : i32, i32
  }
  func.func @transform_1(%arg0: i32) -> (i32, i32) {
    %c0_i32 = arith.constant 0 : i32
    %c0_i32_0 = arith.constant 0 : i32
    return %arg0, %c0_i32 : i32, i32
  }
  func.func @transform_2(%arg0: i32) -> (i32, i32) {
    %c0_i32 = arith.constant 0 : i32
    %c0_i32_0 = arith.constant 0 : i32
    %c0_i32_1 = arith.constant 0 : i32
    return %c0_i32, %c0_i32_0 : i32, i32
  }
  func.func @transform_3(%arg0: i32) -> (i32, i32) {
    %c0_i32 = arith.constant 0 : i32
    %c0_i32_0 = arith.constant 0 : i32
    %c0_i32_1 = arith.constant 0 : i32
    return %c0_i32, %c0_i32_0 : i32, i32
  }
  func.func @transform_4(%arg0: i32) -> (i32, i32) {
    %c0_i32 = arith.constant 0 : i32
    %c0_i32_0 = arith.constant 0 : i32
    %c0_i32_1 = arith.constant 0 : i32
    return %c0_i32, %c0_i32_0 : i32, i32
  }
  func.func @transform_5(%arg0: i32) -> (i32, i32) {
    %c0_i32 = arith.constant 0 : i32
    %c0_i32_0 = arith.constant 0 : i32
    %c0_i32_1 = arith.constant 0 : i32
    return %c0_i32, %c0_i32_0 : i32, i32
  }
  func.func @transform_6(%arg0: i32) -> (i32, i32) {
    %c0_i32 = arith.constant 0 : i32
    %c0_i32_0 = arith.constant 0 : i32
    %c0_i32_1 = arith.constant 0 : i32
    return %c0_i32, %c0_i32_0 : i32, i32
  }
  func.func @transform_7(%arg0: i32) -> (i32, i32) {
    %c0_i32 = arith.constant 0 : i32
    %c0_i32_0 = arith.constant 0 : i32
    %c0_i32_1 = arith.constant 0 : i32
    return %c0_i32, %c0_i32_0 : i32, i32
  }
  func.func @transform_8(%arg0: i32) -> (i32, i32) {
    %c0_i32 = arith.constant 0 : i32
    %c0_i32_0 = arith.constant 0 : i32
    %c0_i32_1 = arith.constant 0 : i32
    return %c0_i32, %c0_i32_0 : i32, i32
  }
  func.func @transform_9(%arg0: i32) -> (i32, i32) {
    %c0_i32 = arith.constant 0 : i32
    %c0_i32_0 = arith.constant 0 : i32
    %c0_i32_1 = arith.constant 0 : i32
    return %c0_i32, %c0_i32_0 : i32, i32
  }
  func.func @transform_10(%arg0: i32) -> (i32, i32) {
    %c0_i32 = arith.constant 0 : i32
    %c0_i32_0 = arith.constant 0 : i32
    %c0_i32_1 = arith.constant 0 : i32
    return %c0_i32, %c0_i32_0 : i32, i32
  }
  func.func @transform_11(%arg0: i32) -> (i32, i32) {
    %c0_i32 = arith.constant 0 : i32
    %c0_i32_0 = arith.constant 0 : i32
    return %c0_i32, %arg0 : i32, i32
  }
}

</mosaic_0001>

<llo_original>
// kernel: altnet_forward.1
$region0: #{altnet_forward.1}
  #allocation0 [shape = 'u32[]', space=smem, size = 0x4, offset = 0x4, fixed_abs, tag = 'smem constant byte address 0x4 - core index']
  #allocation1 [shape = 'u32[144,128]{1,0:T(1,128)}', space=vmem, size = 0x12000, scoped, tag = 'internal scratch']
  #allocation2 [shape = 'f32[1,1]{1,0:T(1,128)S(1)}', space=vmem, size = 0x200, scoped, tag = 'scoped memory for altnet_forward.1']
  %s0 = inlined_call_operand.vmem [shape: f32[512,16], index: 0, kind: input, shape index: {}]
  %s1 = inlined_call_operand.vmem [shape: f32[512,16], index: 1, kind: input, shape index: {}]
  %s2 = inlined_call_operand.vmem [shape: bf16[16,128], index: 2, kind: input, shape index: {}]
  %s3 = inlined_call_operand.vmem [shape: bf16[16,128], index: 3, kind: input, shape index: {}]
  %s4 = inlined_call_operand.vmem [shape: f32[1,128], index: 4, kind: input, shape index: {}]
  %s5 = inlined_call_operand.vmem [shape: bf16[128,128], index: 5, kind: input, shape index: {}]
  %s6 = inlined_call_operand.vmem [shape: f32[1,128], index: 6, kind: input, shape index: {}]
  %s7 = inlined_call_operand.vmem [shape: bf16[128,128], index: 7, kind: input, shape index: {}]
  %s8 = inlined_call_operand.vmem [shape: f32[1,128], index: 8, kind: input, shape index: {}]
  %s9 = inlined_call_operand.vmem [shape: bf16[1,128], index: 9, kind: input, shape index: {}]
  %s10 = inlined_call_operand.<no memory space> [shape: f32[1,1], index: 10, kind: input, shape index: {}]
  %s11 = inlined_call_operand.hbm [shape: f32[1,512], index: 11, kind: output, shape index: {}]
  %s12 = sld [smem:[#allocation0]]
  $region77: #{altnet_forward.1} parent=0
    _
  %s14 = ssub.s32 1, %s12
  %s15 = scalar_select 0, %s14, %s12
  %v16 = vstv %s10
  %17 = vst [vmem:[#allocation2] sm:$0x1] %v16
  $region1: #{altnet_forward.1} parent=0
    #allocation3 [shape = 'u8[1024]{0}', space=vmem, size = 0x400, scoped, tag = 'output window, operand 0']
    #allocation4 [shape = 's32[2]{0}', space=sflag, size = 0x8, scoped, tag = 'scoped memory for altnet_forward.1']
    %18 = vsyncpa [#allocation4], 0
    %s19 = scalar_lea.sflag [#allocation4], 1
    %20 = vsyncpa %s19, 0
    loop: start=0, step=1, limit=6
    $region2: #{altnet_forward.1} parent=1 // loop_pre_header
      _
    $region3: #{altnet_forward.1} parent=1 // loop_header
      %s22 = sphi 0, %s26
      %p23 = scmp.ge.s32.totalorder %s22, 6
      %s32 = sphi 0, %s34
      %s35 = sphi 0, %s32
      %s36 = sphi 0, %s35
      %s52 = sphi 0, %s36
      %s58 = sphi 0, %s60
      %s61 = sphi 0, %s58
      %s62 = sphi 0, %s61
      %s78 = sphi 0, %s62
      %s82 = sphi 0, %s82
      %s84 = sphi 0, %s82
      %s85 = sphi 0, %s84
      %s99 = sphi 0, %s85
      %s103 = sphi 0, %s103
      %s105 = sphi 0, %s103
      %s106 = sphi 0, %s105
      %s120 = sphi 0, %s106
      %s124 = sphi 0, %s124
      %s126 = sphi 0, %s124
      %s127 = sphi 0, %s126
      %s141 = sphi 0, %s127
      %s145 = sphi 0, %s145
      %s147 = sphi 0, %s145
      %s148 = sphi 0, %s147
      %s162 = sphi 0, %s148
      %s166 = sphi 0, %s166
      %s168 = sphi 0, %s166
      %s169 = sphi 0, %s168
      %s183 = sphi 0, %s169
      %s187 = sphi 0, %s187
      %s189 = sphi 0, %s187
      %s190 = sphi 0, %s189
      %s204 = sphi 0, %s190
      %s208 = sphi 0, %s208
      %s210 = sphi 0, %s208
      %s211 = sphi 0, %s210
      %s225 = sphi 0, %s211
      %s229 = sphi 0, %s229
      %s231 = sphi 0, %s229
      %s232 = sphi 0, %s231
      %s246 = sphi 0, %s232
      %s250 = sphi 0, %s250
      %s252 = sphi 0, %s250
      %s253 = sphi 0, %s252
      %s267 = sphi 0, %s253
      %s273 = sphi 0, %s275
      %s276 = sphi 0, %s273
      %s277 = sphi 0, %s276
      %s293 = sphi 0, %s277
    $region4: #{altnet_forward.1} parent=1 // loop_header_branch
      %25 = sbr.rel (%p23) target = $region8
    $region5: #{altnet_forward.1} parent=1 // loop_body
      %s27 = ssub.s32 %s22, 1
      %s28 = ssub.s32 %s22, 2
      %s29 = sadd.s32 %s22, 1
      %s30 = ssub.s32 %s22, %s29
      %p31 = scmp.eq.s32.totalorder %s30, 0
      %s33 = sadd.s32 %s32, 1
      %s34 = scalar_select %p31, %s32, %s33
      %p37 = pneg %p31
      %p38 = scmp.eq.s32.totalorder %s22, 3
      %p39 = por %p37, %p38
      %p40 = scmp.ne.s32.totalorder %s32, %s35
      %p41 = scmp.eq.s32.totalorder %s22, 0
      %p42 = por %p40, %p41
      %p43 = scmp.ne.s32.totalorder %s32, %s35
      %p44 = scmp.eq.s32.totalorder %s27, 3
      %p45 = por %p43, %p44
      %p46 = scmp.ne.s32.totalorder %s35, %s36
      %p47 = scmp.eq.s32.totalorder %s27, 0
      %p48 = por %p46, %p47
      %p49 = scmp.ne.s32.totalorder %s35, %s36
      %p50 = scmp.eq.s32.totalorder %s28, 3
      %p51 = por %p49, %p50
      %p53 = scmp.ne.s32.totalorder %s36, %s52
      %p54 = scmp.eq.s32.totalorder %s28, 0
      %p55 = por %p53, %p54
      %s56 = ssub.s32 %s22, %s29
      %p57 = scmp.eq.s32.totalorder %s56, 0
      %s59 = sadd.s32 %s58, 1
      %s60 = scalar_select %p57, %s58, %s59
      %p63 = pneg %p57
      %p64 = scmp.eq.s32.totalorder %s22, 3
      %p65 = por %p63, %p64
      %p66 = scmp.ne.s32.totalorder %s58, %s61
      %p67 = scmp.eq.s32.totalorder %s22, 0
      %p68 = por %p66, %p67
      %p69 = scmp.ne.s32.totalorder %s58, %s61
      %p70 = scmp.eq.s32.totalorder %s27, 3
      %p71 = por %p69, %p70
      %p72 = scmp.ne.s32.totalorder %s61, %s62
      %p73 = scmp.eq.s32.totalorder %s27, 0
      %p74 = por %p72, %p73
      %p75 = scmp.ne.s32.totalorder %s61, %s62
      %p76 = scmp.eq.s32.totalorder %s28, 3
      %p77 = por %p75, %p76
      %p79 = scmp.ne.s32.totalorder %s62, %s78
      %p80 = scmp.eq.s32.totalorder %s28, 0
      %p81 = por %p79, %p80
      %s83 = sadd.s32 %s82, 1
      %p86 = scmp.eq.s32.totalorder %s22, 3
      %p87 = scmp.ne.s32.totalorder %s82, %s84
      %p88 = scmp.eq.s32.totalorder %s22, 0
      %p89 = por %p87, %p88
      %p90 = scmp.ne.s32.totalorder %s82, %s84
      %p91 = scmp.eq.s32.totalorder %s27, 3
      %p92 = por %p90, %p91
      %p93 = scmp.ne.s32.totalorder %s84, %s85
      %p94 = scmp.eq.s32.totalorder %s27, 0
      %p95 = por %p93, %p94
      %p96 = scmp.ne.s32.totalorder %s84, %s85
      %p97 = scmp.eq.s32.totalorder %s28, 3
      %p98 = por %p96, %p97
      %p100 = scmp.ne.s32.totalorder %s85, %s99
      %p101 = scmp.eq.s32.totalorder %s28, 0
      %p102 = por %p100, %p101
      %s104 = sadd.s32 %s103, 1
      %p107 = scmp.eq.s32.totalorder %s22, 3
      %p108 = scmp.ne.s32.totalorder %s103, %s105
      %p109 = scmp.eq.s32.totalorder %s22, 0
      %p110 = por %p108, %p109
      %p111 = scmp.ne.s32.totalorder %s103, %s105
      %p112 = scmp.eq.s32.totalorder %s27, 3
      %p113 = por %p111, %p112
      %p114 = scmp.ne.s32.totalorder %s105, %s106
      %p115 = scmp.eq.s32.totalorder %s27, 0
      %p116 = por %p114, %p115
      %p117 = scmp.ne.s32.totalorder %s105, %s106
      %p118 = scmp.eq.s32.totalorder %s28, 3
      %p119 = por %p117, %p118
      %p121 = scmp.ne.s32.totalorder %s106, %s120
      %p122 = scmp.eq.s32.totalorder %s28, 0
      %p123 = por %p121, %p122
      %s125 = sadd.s32 %s124, 1
      %p128 = scmp.eq.s32.totalorder %s22, 3
      %p129 = scmp.ne.s32.totalorder %s124, %s126
      %p130 = scmp.eq.s32.totalorder %s22, 0
      %p131 = por %p129, %p130
      %p132 = scmp.ne.s32.totalorder %s124, %s126
      %p133 = scmp.eq.s32.totalorder %s27, 3
      %p134 = por %p132, %p133
      %p135 = scmp.ne.s32.totalorder %s126, %s127
      %p136 = scmp.eq.s32.totalorder %s27, 0
      %p137 = por %p135, %p136
      %p138 = scmp.ne.s32.totalorder %s126, %s127
      %p139 = scmp.eq.s32.totalorder %s28, 3
      %p140 = por %p138, %p139
      %p142 = scmp.ne.s32.totalorder %s127, %s141
      %p143 = scmp.eq.s32.totalorder %s28, 0
      %p144 = por %p142, %p143
      %s146 = sadd.s32 %s145, 1
      %p149 = scmp.eq.s32.totalorder %s22, 3
      %p150 = scmp.ne.s32.totalorder %s145, %s147
      %p151 = scmp.eq.s32.totalorder %s22, 0
      %p152 = por %p150, %p151
      %p153 = scmp.ne.s32.totalorder %s145, %s147
      %p154 = scmp.eq.s32.totalorder %s27, 3
      %p155 = por %p153, %p154
      %p156 = scmp.ne.s32.totalorder %s147, %s148
      %p157 = scmp.eq.s32.totalorder %s27, 0
      %p158 = por %p156, %p157
      %p159 = scmp.ne.s32.totalorder %s147, %s148
      %p160 = scmp.eq.s32.totalorder %s28, 3
      %p161 = por %p159, %p160
      %p163 = scmp.ne.s32.totalorder %s148, %s162
      %p164 = scmp.eq.s32.totalorder %s28, 0
      %p165 = por %p163, %p164
      %s167 = sadd.s32 %s166, 1
      %p170 = scmp.eq.s32.totalorder %s22, 3
      %p171 = scmp.ne.s32.totalorder %s166, %s168
      %p172 = scmp.eq.s32.totalorder %s22, 0
      %p173 = por %p171, %p172
      %p174 = scmp.ne.s32.totalorder %s166, %s168
      %p175 = scmp.eq.s32.totalorder %s27, 3
      %p176 = por %p174, %p175
      %p177 = scmp.ne.s32.totalorder %s168, %s169
      %p178 = scmp.eq.s32.totalorder %s27, 0
      %p179 = por %p177, %p178
      %p180 = scmp.ne.s32.totalorder %s168, %s169
      %p181 = scmp.eq.s32.totalorder %s28, 3
      %p182 = por %p180, %p181
      %p184 = scmp.ne.s32.totalorder %s169, %s183
      %p185 = scmp.eq.s32.totalorder %s28, 0
      %p186 = por %p184, %p185
      %s188 = sadd.s32 %s187, 1
      %p191 = scmp.eq.s32.totalorder %s22, 3
      %p192 = scmp.ne.s32.totalorder %s187, %s189
      %p193 = scmp.eq.s32.totalorder %s22, 0
      %p194 = por %p192, %p193
      %p195 = scmp.ne.s32.totalorder %s187, %s189
      %p196 = scmp.eq.s32.totalorder %s27, 3
      %p197 = por %p195, %p196
      %p198 = scmp.ne.s32.totalorder %s189, %s190
      %p199 = scmp.eq.s32.totalorder %s27, 0
      %p200 = por %p198, %p199
      %p201 = scmp.ne.s32.totalorder %s189, %s190
      %p202 = scmp.eq.s32.totalorder %s28, 3
      %p203 = por %p201, %p202
      %p205 = scmp.ne.s32.totalorder %s190, %s204
      %p206 = scmp.eq.s32.totalorder %s28, 0
      %p207 = por %p205, %p206
      %s209 = sadd.s32 %s208, 1
      %p212 = scmp.eq.s32.totalorder %s22, 3
      %p213 = scmp.ne.s32.totalorder %s208, %s210
      %p214 = scmp.eq.s32.totalorder %s22, 0
      %p215 = por %p213, %p214
      %p216 = scmp.ne.s32.totalorder %s208, %s210
      %p217 = scmp.eq.s32.totalorder %s27, 3
      %p218 = por %p216, %p217
      %p219 = scmp.ne.s32.totalorder %s210, %s211
      %p220 = scmp.eq.s32.totalorder %s27, 0
      %p221 = por %p219, %p220
      %p222 = scmp.ne.s32.totalorder %s210, %s211
      %p223 = scmp.eq.s32.totalorder %s28, 3
      %p224 = por %p222, %p223
      %p226 = scmp.ne.s32.totalorder %s211, %s225
      %p227 = scmp.eq.s32.totalorder %s28, 0
      %p228 = por %p226, %p227
      %s230 = sadd.s32 %s229, 1
      %p233 = scmp.eq.s32.totalorder %s22, 3
      %p234 = scmp.ne.s32.totalorder %s229, %s231
      %p235 = scmp.eq.s32.totalorder %s22, 0
      %p236 = por %p234, %p235
      %p237 = scmp.ne.s32.totalorder %s229, %s231
      %p238 = scmp.eq.s32.totalorder %s27, 3
      %p239 = por %p237, %p238
      %p240 = scmp.ne.s32.totalorder %s231, %s232
      %p241 = scmp.eq.s32.totalorder %s27, 0
      %p242 = por %p240, %p241
      %p243 = scmp.ne.s32.totalorder %s231, %s232
      %p244 = scmp.eq.s32.totalorder %s28, 3
      %p245 = por %p243, %p244
      %p247 = scmp.ne.s32.totalorder %s232, %s246
      %p248 = scmp.eq.s32.totalorder %s28, 0
      %p249 = por %p247, %p248
      %s251 = sadd.s32 %s250, 1
      %p254 = scmp.eq.s32.totalorder %s22, 3
      %p255 = scmp.ne.s32.totalorder %s250, %s252
      %p256 = scmp.eq.s32.totalorder %s22, 0
      %p257 = por %p255, %p256
      %p258 = scmp.ne.s32.totalorder %s250, %s252
      %p259 = scmp.eq.s32.totalorder %s27, 3
      %p260 = por %p258, %p259
      %p261 = scmp.ne.s32.totalorder %s252, %s253
      %p262 = scmp.eq.s32.totalorder %s27, 0
      %p263 = por %p261, %p262
      %p264 = scmp.ne.s32.totalorder %s252, %s253
      %p265 = scmp.eq.s32.totalorder %s28, 3
      %p266 = por %p264, %p265
      %p268 = scmp.ne.s32.totalorder %s253, %s267
      %p269 = scmp.eq.s32.totalorder %s28, 0
      %p270 = por %p268, %p269
      %s271 = ssub.s32 %s22, %s29
      %p272 = scmp.eq.s32.totalorder %s271, 0
      %s274 = sadd.s32 %s273, 1
      %s275 = scalar_select %p272, %s273, %s274
      %p278 = pneg %p272
      %p279 = scmp.eq.s32.totalorder %s22, 3
      %p280 = por %p278, %p279
      %p281 = scmp.ne.s32.totalorder %s273, %s276
      %p282 = scmp.eq.s32.totalorder %s22, 0
      %p283 = por %p281, %p282
      %p284 = scmp.ne.s32.totalorder %s273, %s276
      %p285 = scmp.eq.s32.totalorder %s27, 3
      %p286 = por %p284, %p285
      %p287 = scmp.ne.s32.totalorder %s276, %s277
      %p288 = scmp.eq.s32.totalorder %s27, 0
      %p289 = por %p287, %p288
      %p290 = scmp.ne.s32.totalorder %s276, %s277
      %p291 = scmp.eq.s32.totalorder %s28, 3
      %p292 = por %p290, %p291
      %p294 = scmp.ne.s32.totalorder %s277, %s293
      %p295 = scmp.eq.s32.totalorder %s28, 0
      %p296 = por %p294, %p295
      %p297 = scmp.le.s32.totalorder 1, %s22
      %p298 = scmp.lt.s32.totalorder %s22, 5
      %p299 = pnand %p297, %p298
      %p300 = pneg %p299
      // Predicated region
      $region9: #{altnet_forward.1} parent=5 // pred_check
        _
      $region10: #{altnet_forward.1} parent=5 // pred_check_branch
        %302 = sbr.rel (%p299) target = $region12
      $region11: #{altnet_forward.1} parent=5 // pred_region
        %s303 = ssub.s32 %s22, 1
        // Predicated region
        $region13: #{altnet_forward.1} parent=11 // pred_check
          %p304 = pneg %p95
        $region14: #{altnet_forward.1} parent=11 // pred_check_branch
          %306 = sbr.rel (%p304) target = $region16
        $region15: #{altnet_forward.1} parent=11 // pred_region
          _
        $region16: #{altnet_forward.1} parent=11 // pred_fallthru
          _
        // Predicated region
        $region17: #{altnet_forward.1} parent=11 // pred_check
          %p307 = pneg %p116
        $region18: #{altnet_forward.1} parent=11 // pred_check_branch
          %309 = sbr.rel (%p307) target = $region20
        $region19: #{altnet_forward.1} parent=11 // pred_region
          _
        $region20: #{altnet_forward.1} parent=11 // pred_fallthru
          _
        // Predicated region
        $region21: #{altnet_forward.1} parent=11 // pred_check
          %p310 = pneg %p137
        $region22: #{altnet_forward.1} parent=11 // pred_check_branch
          %312 = sbr.rel (%p310) target = $region24
        $region23: #{altnet_forward.1} parent=11 // pred_region
          _
        $region24: #{altnet_forward.1} parent=11 // pred_fallthru
          _
        // Predicated region
        $region25: #{altnet_forward.1} parent=11 // pred_check
          %p313 = pneg %p158
        $region26: #{altnet_forward.1} parent=11 // pred_check_branch
          %315 = sbr.rel (%p313) target = $region28
        $region27: #{altnet_forward.1} parent=11 // pred_region
          _
        $region28: #{altnet_forward.1} parent=11 // pred_fallthru
          _
        // Predicated region
        $region29: #{altnet_forward.1} parent=11 // pred_check
          %p316 = pneg %p179
        $region30: #{altnet_forward.1} parent=11 // pred_check_branch
          %318 = sbr.rel (%p316) target = $region32
        $region31: #{altnet_forward.1} parent=11 // pred_region
          _
        $region32: #{altnet_forward.1} parent=11 // pred_fallthru
          _
        // Predicated region
        $region33: #{altnet_forward.1} parent=11 // pred_check
          %p319 = pneg %p200
        $region34: #{altnet_forward.1} parent=11 // pred_check_branch
          %321 = sbr.rel (%p319) target = $region36
        $region35: #{altnet_forward.1} parent=11 // pred_region
          _
        $region36: #{altnet_forward.1} parent=11 // pred_fallthru
          _
        // Predicated region
        $region37: #{altnet_forward.1} parent=11 // pred_check
          %p322 = pneg %p221
        $region38: #{altnet_forward.1} parent=11 // pred_check_branch
          %324 = sbr.rel (%p322) target = $region40
        $region39: #{altnet_forward.1} parent=11 // pred_region
          _
        $region40: #{altnet_forward.1} parent=11 // pred_fallthru
          _
        // Predicated region
        $region41: #{altnet_forward.1} parent=11 // pred_check
          %p325 = pneg %p242
        $region42: #{altnet_forward.1} parent=11 // pred_check_branch
          %327 = sbr.rel (%p325) target = $region44
        $region43: #{altnet_forward.1} parent=11 // pred_region
          _
        $region44: #{altnet_forward.1} parent=11 // pred_fallthru
          _
        // Predicated region
        $region45: #{altnet_forward.1} parent=11 // pred_check
          %p328 = pneg %p263
        $region46: #{altnet_forward.1} parent=11 // pred_check_branch
          %330 = sbr.rel (%p328) target = $region48
        $region47: #{altnet_forward.1} parent=11 // pred_region
          _
        $region48: #{altnet_forward.1} parent=11 // pred_fallthru
          _
      $region12: #{altnet_forward.1} parent=5 // pred_fallthru
        _
      %p331 = scmp.lt.s32.totalorder %s22, 4
      // Predicated region
      $region49: #{altnet_forward.1} parent=5 // pred_check
        %p332 = pneg %p331
      $region50: #{altnet_forward.1} parent=5 // pred_check_branch
        %334 = sbr.rel (%p332) target = $region52
      $region51: #{altnet_forward.1} parent=5 // pred_region
        // Predicated region
        $region53: #{altnet_forward.1} parent=51 // pred_check
          %p335 = pneg %p42
        $region54: #{altnet_forward.1} parent=51 // pred_check_branch
          %337 = sbr.rel (%p335) target = $region56
        $region55: #{altnet_forward.1} parent=51 // pred_region
          %s338 = smul.u32 16, %s22
          %p339 = scmp.lt.s32.totalorder %s338, 63
          %s340 = scalar_select %p339, %s338, 63
          %s341 = smul.addr %s340, 8
          %s342 = scalar_lea.vmem %s0, %s341
          %s343 = smul.u32 16, %s22
        $region56: #{altnet_forward.1} parent=51 // pred_fallthru
          _
        // Predicated region
        $region57: #{altnet_forward.1} parent=51 // pred_check
          %p344 = pneg %p68
        $region58: #{altnet_forward.1} parent=51 // pred_check_branch
          %346 = sbr.rel (%p344) target = $region60
        $region59: #{altnet_forward.1} parent=51 // pred_region
          %s347 = smul.u32 16, %s22
          %p348 = scmp.lt.s32.totalorder %s347, 63
          %s349 = scalar_select %p348, %s347, 63
          %s350 = smul.addr %s349, 8
          %s351 = scalar_lea.vmem %s1, %s350
          %s352 = smul.u32 16, %s22
        $region60: #{altnet_forward.1} parent=51 // pred_fallthru
          _
      $region52: #{altnet_forward.1} parent=5 // pred_fallthru
        _
      %p353 = scmp.le.s32.totalorder 1, %s22
      %p354 = scmp.lt.s32.totalorder %s22, 5
      %p355 = pnand %p353, %p354
      %p356 = pneg %p355
      // Predicated region
      $region61: #{altnet_forward.1} parent=5 // pred_check
        _
      $region62: #{altnet_forward.1} parent=5 // pred_check_branch
        %358 = sbr.rel (%p355) target = $region64
      $region63: #{altnet_forward.1} parent=5 // pred_region
        %s359 = ssub.s32 %s22, 1
        %s360 = smul.u32 16, %s27
        %p361 = scmp.lt.s32.totalorder %s360, 63
        %s362 = scalar_select %p361, %s360, 63
        %s363 = smul.addr %s362, 8
        %s364 = scalar_lea.vmem %s0, %s363
        %p365 = pneg %p48
        %p366 = pneg %p45
        %s367 = smul.u32 16, %s27
        %p368 = scmp.lt.s32.totalorder %s367, 63
        %s369 = scalar_select %p368, %s367, 63
        %s370 = smul.addr %s369, 8
        %s371 = scalar_lea.vmem %s1, %s370
        %p372 = pneg %p74
        %p373 = pneg %p71
        %p374 = pneg %p95
        %p375 = pneg %p92
        %p376 = pneg %p116
        %p377 = pneg %p113
        %p378 = pneg %p137
        %p379 = pneg %p134
        %p380 = pneg %p158
        %p381 = pneg %p155
        %p382 = pneg %p179
        %p383 = pneg %p176
        %p384 = pneg %p200
        %p385 = pneg %p197
        %p386 = pneg %p221
        %p387 = pneg %p218
        %p388 = pneg %p242
        %p389 = pneg %p239
        %p390 = pneg %p263
        %p391 = pneg %p260
        %p392 = pneg %p289
        %p393 = pneg %p286
        %s394 = sand.u32 %s276, 1
        %s395 = scalar_lea.sflag [#allocation4], %s394
        %s396 = sand.u32 %s276, 1
        %s397 = scalar_lea.vmem [#allocation3], %s396
        %s398 = smul.u32 16, %s27
        %p399 = scmp.lt.s32.totalorder %s398, 63
        %s400 = scalar_select %p399, %s398, 63
        %s401 = smul.addr %s400, 8
        %s402 = scalar_lea.vmem %s0, %s401
        %s403 = smul.u32 16, %s27
        %s404 = smul.u32 16, %s27
        %p405 = scmp.lt.s32.totalorder %s404, 63
        %s406 = scalar_select %p405, %s404, 63
        %s407 = smul.addr %s406, 8
        %s408 = scalar_lea.vmem %s1, %s407
        %s409 = smul.u32 16, %s27
        %v411 = vld [vmem:[%s402] sm:$0xff]
        %v412 = vld [vmem:[%s402 + $0x8] sm:$0xff]
        %v413 = vld [vmem:[%s402 + $0x10] sm:$0xff]
        %v414 = vld [vmem:[%s402 + $0x18] sm:$0xff]
        %v415 = vld [vmem:[%s402 + $0x20] sm:$0xff]
        %v416 = vld [vmem:[%s402 + $0x28] sm:$0xff]
        %v417 = vld [vmem:[%s402 + $0x30] sm:$0xff]
        %v418 = vld [vmem:[%s402 + $0x38] sm:$0xff]
        %v419 = vld [vmem:[%s402 + $0x40] sm:$0xff]
        %v420 = vld [vmem:[%s402 + $0x48] sm:$0xff]
        %v421 = vld [vmem:[%s402 + $0x50] sm:$0xff]
        %v422 = vld [vmem:[%s402 + $0x58] sm:$0xff]
        %v423 = vld [vmem:[%s402 + $0x60] sm:$0xff]
        %v424 = vld [vmem:[%s402 + $0x68] sm:$0xff]
        %v425 = vld [vmem:[%s402 + $0x70] sm:$0xff]
        %v426 = vld [vmem:[%s402 + $0x78] sm:$0xff]
        %v427 = vpack.c.bf16 %v412, %v411
        %v428 = vpack.c.bf16 %v414, %v413
        %v429 = vpack.c.bf16 %v416, %v415
        %v430 = vpack.c.bf16 %v418, %v417
        %v431 = vpack.c.bf16 %v420, %v419
        %v432 = vpack.c.bf16 %v422, %v421
        %v433 = vpack.c.bf16 %v424, %v423
        %v434 = vpack.c.bf16 %v426, %v425
        %v435 = vld [vmem:[%s408] sm:$0xff]
        %v436 = vld [vmem:[%s408 + $0x8] sm:$0xff]
        %v437 = vld [vmem:[%s408 + $0x10] sm:$0xff]
        %v438 = vld [vmem:[%s408 + $0x18] sm:$0xff]
        %v439 = vld [vmem:[%s408 + $0x20] sm:$0xff]
        %v440 = vld [vmem:[%s408 + $0x28] sm:$0xff]
        %v441 = vld [vmem:[%s408 + $0x30] sm:$0xff]
        %v442 = vld [vmem:[%s408 + $0x38] sm:$0xff]
        %v443 = vld [vmem:[%s408 + $0x40] sm:$0xff]
        %v444 = vld [vmem:[%s408 + $0x48] sm:$0xff]
        %v445 = vld [vmem:[%s408 + $0x50] sm:$0xff]
        %v446 = vld [vmem:[%s408 + $0x58] sm:$0xff]
        %v447 = vld [vmem:[%s408 + $0x60] sm:$0xff]
        %v448 = vld [vmem:[%s408 + $0x68] sm:$0xff]
        %v449 = vld [vmem:[%s408 + $0x70] sm:$0xff]
        %v450 = vld [vmem:[%s408 + $0x78] sm:$0xff]
        %v451 = vpack.c.bf16 %v436, %v435
        %v452 = vpack.c.bf16 %v438, %v437
        %v453 = vpack.c.bf16 %v440, %v439
        %v454 = vpack.c.bf16 %v442, %v441
        %v455 = vpack.c.bf16 %v444, %v443
        %v456 = vpack.c.bf16 %v446, %v445
        %v457 = vpack.c.bf16 %v448, %v447
        %v458 = vpack.c.bf16 %v450, %v449
        %v459 = vld [vmem:[%s2] sm:$0xf]
        %v460 = vld [vmem:[%s2 + $0x4] sm:$0xf]
        %v461 = vld [vmem:[%s3] sm:$0xf]
        %v462 = vld [vmem:[%s3 + $0x4] sm:$0xf]
        %v465 = vunpack.c.l.b16 %v461
        %v466 = vunpack.c.l.b16 %v462
        %v467 = vpack.c.b16 %v466, %v465
        %vm469 = vcmask 130048
        %v471 = vsel %vm469, %v451, 0
        %v474 = vsel %vm469, %v452, 0
        %v477 = vsel %vm469, %v453, 0
        %v480 = vsel %vm469, %v454, 0
        %v483 = vsel %vm469, %v455, 0
        %v486 = vsel %vm469, %v456, 0
        %v489 = vsel %vm469, %v457, 0
        %v492 = vsel %vm469, %v458, 0
        %494 = vmatprep.subr.bf16.mxu0 0
        %495 = vmatpush1.bf16.msra.mxu0 %v467
        %496 = vmatprep.subr.bf16.mxu0 0
        %497 = vmatpush1.bf16.msra.mxu0 0
        %498 = vmatprep.subr.bf16.mxu0 0
        %499 = vmatpush1.bf16.msra.mxu0 0
        %500 = vmatprep.subr.bf16.mxu0 0
        %501 = vmatpush1.bf16.msra.mxu0 0
        %502 = vmatprep.subr.bf16.mxu0 0
        %503 = vmatpush1.bf16.msra.mxu0 0
        %504 = vmatprep.subr.bf16.mxu0 0
        %505 = vmatpush1.bf16.msra.mxu0 0
        %506 = vmatprep.subr.bf16.mxu0 0
        %507 = vmatpush1.bf16.msra.mxu0 0
        %508 = vmatprep.subr.bf16.mxu0 0
        %509 = vmatpush1.bf16.msra.mxu0 0
        %510 = vmatprep.subr.bf16.mxu0 0
        %511 = vmatpush1.bf16.msra.mxu0 0
        %512 = vmatprep.subr.bf16.mxu0 0
        %513 = vmatpush1.bf16.msra.mxu0 0
        %514 = vmatprep.subr.bf16.mxu0 0
        %515 = vmatpush1.bf16.msra.mxu0 0
        %516 = vmatprep.subr.bf16.mxu0 0
        %517 = vmatpush1.bf16.msra.mxu0 0
        %518 = vmatprep.subr.bf16.mxu0 0
        %519 = vmatpush1.bf16.msra.mxu0 0
        %520 = vmatprep.subr.bf16.mxu0 0
        %521 = vmatpush1.bf16.msra.mxu0 0
        %522 = vmatprep.subr.bf16.mxu0 0
        %523 = vmatpush1.bf16.msra.mxu0 0
        %524 = vmatprep.subr.bf16.mxu0 0
        %525 = vmatpush1.bf16.msra.mxu0 0
        %526 = vmatprep.mubr.bf16.mxu0 0
        %527 = vmatmul.mubr.bf16.gmra.mrb[0].mxu0 %v471
        %v528 = vpop.f32.mrb[0].mxu0
        %v529 = vadd.f32 0.0, %v528
        %v530 = vpop.f32.mrb[0].mxu0
        %v531 = vpop.f32.mrb[0].mxu0
        %v532 = vadd.f32 0.0, %v531
        %v533 = vpop.f32.mrb[0].mxu0
        %534 = vmatprep.mubr.bf16.mxu0 0
        %535 = vmatmul.mubr.bf16.gmra.mrb[0].mxu0 %v474
        %v536 = vpop.f32.mrb[0].mxu0
        %v537 = vadd.f32 0.0, %v536
        %v538 = vpop.f32.mrb[0].mxu0
        %v539 = vpop.f32.mrb[0].mxu0
        %v540 = vadd.f32 0.0, %v539
        %v541 = vpop.f32.mrb[0].mxu0
        %542 = vmatprep.mubr.bf16.mxu0 0
        %543 = vmatmul.mubr.bf16.gmra.mrb[0].mxu0 %v477
        %v544 = vpop.f32.mrb[0].mxu0
        %v545 = vadd.f32 0.0, %v544
        %v546 = vpop.f32.mrb[0].mxu0
        %v547 = vpop.f32.mrb[0].mxu0
        %v548 = vadd.f32 0.0, %v547
        %v549 = vpop.f32.mrb[0].mxu0
        %550 = vmatprep.mubr.bf16.mxu0 0
        %551 = vmatmul.mubr.bf16.gmra.mrb[0].mxu0 %v480
        %v552 = vpop.f32.mrb[0].mxu0
        %v553 = vadd.f32 0.0, %v552
        %v554 = vpop.f32.mrb[0].mxu0
        %v555 = vpop.f32.mrb[0].mxu0
        %v556 = vadd.f32 0.0, %v555
        %v557 = vpop.f32.mrb[0].mxu0
        %558 = vmatprep.mubr.bf16.mxu0 0
        %559 = vmatmul.mubr.bf16.gmra.mrb[0].mxu0 %v483
        %v560 = vpop.f32.mrb[0].mxu0
        %v561 = vadd.f32 0.0, %v560
        %v562 = vpop.f32.mrb[0].mxu0
        %v563 = vpop.f32.mrb[0].mxu0
        %v564 = vadd.f32 0.0, %v563
        %v565 = vpop.f32.mrb[0].mxu0
        %566 = vmatprep.mubr.bf16.mxu0 0
        %567 = vmatmul.mubr.bf16.gmra.mrb[0].mxu0 %v486
        %v568 = vpop.f32.mrb[0].mxu0
        %v569 = vadd.f32 0.0, %v568
        %v570 = vpop.f32.mrb[0].mxu0
        %v571 = vpop.f32.mrb[0].mxu0
        %v572 = vadd.f32 0.0, %v571
        %v573 = vpop.f32.mrb[0].mxu0
        %574 = vmatprep.mubr.bf16.mxu0 0
        %575 = vmatmul.mubr.bf16.gmra.mrb[0].mxu0 %v489
        %v576 = vpop.f32.mrb[0].mxu0
        %v577 = vadd.f32 0.0, %v576
        %v578 = vpop.f32.mrb[0].mxu0
        %v579 = vpop.f32.mrb[0].mxu0
        %v580 = vadd.f32 0.0, %v579
        %v581 = vpop.f32.mrb[0].mxu0
        %582 = vmatprep.mubr.bf16.mxu0 0
        %583 = vmatmul.mubr.bf16.gmra.mrb[0].mxu0 %v492
        %v584 = vpop.f32.mrb[0].mxu0
        %v585 = vadd.f32 0.0, %v584
        %v586 = vpop.f32.mrb[0].mxu0
        %v587 = vpop.f32.mrb[0].mxu0
        %v588 = vadd.f32 0.0, %v587
        %v589 = vpop.f32.mrb[0].mxu0
        %590 = vdwg.mxu0
        %v593 = vunpack.c.l.b16 %v459
        %v594 = vunpack.c.l.b16 %v460
        %v595 = vpack.c.b16 %v594, %v593
        %v598 = vsel %vm469, %v427, 0
        %v601 = vsel %vm469, %v428, 0
        %v604 = vsel %vm469, %v429, 0
        %v607 = vsel %vm469, %v430, 0
        %v610 = vsel %vm469, %v431, 0
        %v613 = vsel %vm469, %v432, 0
        %v616 = vsel %vm469, %v433, 0
        %v619 = vsel %vm469, %v434, 0
        %621 = vmatprep.subr.bf16.mxu0 0
        %622 = vmatpush1.bf16.msra.mxu0 %v595
        %623 = vmatprep.subr.bf16.mxu0 0
        %624 = vmatpush1.bf16.msra.mxu0 0
        %625 = vmatprep.subr.bf16.mxu0 0
        %626 = vmatpush1.bf16.msra.mxu0 0
        %627 = vmatprep.subr.bf16.mxu0 0
        %628 = vmatpush1.bf16.msra.mxu0 0
        %629 = vmatprep.subr.bf16.mxu0 0
        %630 = vmatpush1.bf16.msra.mxu0 0
        %631 = vmatprep.subr.bf16.mxu0 0
        %632 = vmatpush1.bf16.msra.mxu0 0
        %633 = vmatprep.subr.bf16.mxu0 0
        %634 = vmatpush1.bf16.msra.mxu0 0
        %635 = vmatprep.subr.bf16.mxu0 0
        %636 = vmatpush1.bf16.msra.mxu0 0
        %637 = vmatprep.subr.bf16.mxu0 0
        %638 = vmatpush1.bf16.msra.mxu0 0
        %639 = vmatprep.subr.bf16.mxu0 0
        %640 = vmatpush1.bf16.msra.mxu0 0
        %641 = vmatprep.subr.bf16.mxu0 0
        %642 = vmatpush1.bf16.msra.mxu0 0
        %643 = vmatprep.subr.bf16.mxu0 0
        %644 = vmatpush1.bf16.msra.mxu0 0
        %645 = vmatprep.subr.bf16.mxu0 0
        %646 = vmatpush1.bf16.msra.mxu0 0
        %647 = vmatprep.subr.bf16.mxu0 0
        %648 = vmatpush1.bf16.msra.mxu0 0
        %649 = vmatprep.subr.bf16.mxu0 0
        %650 = vmatpush1.bf16.msra.mxu0 0
        %651 = vmatprep.subr.bf16.mxu0 0
        %652 = vmatpush1.bf16.msra.mxu0 0
        %653 = vmatprep.mubr.bf16.mxu0 0
        %654 = vmatmul.mubr.bf16.gmra.mrb[0].mxu0 %v598
        %v655 = vpop.f32.mrb[0].mxu0
        %v656 = vadd.f32 %v529, %v655
        %v657 = vpop.f32.mrb[0].mxu0
        %v658 = vpop.f32.mrb[0].mxu0
        %v659 = vadd.f32 %v532, %v658
        %v660 = vpop.f32.mrb[0].mxu0
        %661 = vmatprep.mubr.bf16.mxu0 0
        %662 = vmatmul.mubr.bf16.gmra.mrb[0].mxu0 %v601
        %v663 = vpop.f32.mrb[0].mxu0
        %v664 = vadd.f32 %v537, %v663
        %v665 = vpop.f32.mrb[0].mxu0
        %v666 = vpop.f32.mrb[0].mxu0
        %v667 = vadd.f32 %v540, %v666
        %v668 = vpop.f32.mrb[0].mxu0
        %669 = vmatprep.mubr.bf16.mxu0 0
        %670 = vmatmul.mubr.bf16.gmra.mrb[0].mxu0 %v604
        %v671 = vpop.f32.mrb[0].mxu0
        %v672 = vadd.f32 %v545, %v671
        %v673 = vpop.f32.mrb[0].mxu0
        %v674 = vpop.f32.mrb[0].mxu0
        %v675 = vadd.f32 %v548, %v674
        %v676 = vpop.f32.mrb[0].mxu0
        %677 = vmatprep.mubr.bf16.mxu0 0
        %678 = vmatmul.mubr.bf16.gmra.mrb[0].mxu0 %v607
        %v679 = vpop.f32.mrb[0].mxu0
        %v680 = vadd.f32 %v553, %v679
        %v681 = vpop.f32.mrb[0].mxu0
        %v682 = vpop.f32.mrb[0].mxu0
        %v683 = vadd.f32 %v556, %v682
        %v684 = vpop.f32.mrb[0].mxu0
        %685 = vmatprep.mubr.bf16.mxu0 0
        %686 = vmatmul.mubr.bf16.gmra.mrb[0].mxu0 %v610
        %v687 = vpop.f32.mrb[0].mxu0
        %v688 = vadd.f32 %v561, %v687
        %v689 = vpop.f32.mrb[0].mxu0
        %v690 = vpop.f32.mrb[0].mxu0
        %v691 = vadd.f32 %v564, %v690
        %v692 = vpop.f32.mrb[0].mxu0
        %693 = vmatprep.mubr.bf16.mxu0 0
        %694 = vmatmul.mubr.bf16.gmra.mrb[0].mxu0 %v613
        %v695 = vpop.f32.mrb[0].mxu0
        %v696 = vadd.f32 %v569, %v695
        %v697 = vpop.f32.mrb[0].mxu0
        %v698 = vpop.f32.mrb[0].mxu0
        %v699 = vadd.f32 %v572, %v698
        %v700 = vpop.f32.mrb[0].mxu0
        %701 = vmatprep.mubr.bf16.mxu0 0
        %702 = vmatmul.mubr.bf16.gmra.mrb[0].mxu0 %v616
        %v703 = vpop.f32.mrb[0].mxu0
        %v704 = vadd.f32 %v577, %v703
        %v705 = vpop.f32.mrb[0].mxu0
        %v706 = vpop.f32.mrb[0].mxu0
        %v707 = vadd.f32 %v580, %v706
        %v708 = vpop.f32.mrb[0].mxu0
        %709 = vmatprep.mubr.bf16.mxu0 0
        %710 = vmatmul.mubr.bf16.gmra.mrb[0].mxu0 %v619
        %v711 = vpop.f32.mrb[0].mxu0
        %v712 = vadd.f32 %v585, %v711
        %v713 = vpop.f32.mrb[0].mxu0
        %v714 = vpop.f32.mrb[0].mxu0
        %v715 = vadd.f32 %v588, %v714
        %v716 = vpop.f32.mrb[0].mxu0
        %717 = vdwg.mxu0
        %v718 = vld [vmem:[%s4] sm:$0x1]
        %v720 = vlaneseq
        %v721 = vshrl.u32 %v720, 7
        %v722 = vsub.s32 0, %v721
        %v723 = vrot.slane %v718, %v722
        %v725 = vadd.f32 %v656, %v723
        %v726 = vadd.f32 %v659, %v723
        %v727 = vadd.f32 %v664, %v723
        %v728 = vadd.f32 %v667, %v723
        %v729 = vadd.f32 %v672, %v723
        %v730 = vadd.f32 %v675, %v723
        %v731 = vadd.f32 %v680, %v723
        %v732 = vadd.f32 %v683, %v723
        %v733 = vadd.f32 %v688, %v723
        %v734 = vadd.f32 %v691, %v723
        %v735 = vadd.f32 %v696, %v723
        %v736 = vadd.f32 %v699, %v723
        %v737 = vadd.f32 %v704, %v723
        %v738 = vadd.f32 %v707, %v723
        %v739 = vadd.f32 %v712, %v723
        %v740 = vadd.f32 %v715, %v723
        %v741 = vmax.f32 %v725, 0.0
        %v742 = vmax.f32 %v726, 0.0
        %v743 = vmax.f32 %v727, 0.0
        %v744 = vmax.f32 %v728, 0.0
        %v745 = vmax.f32 %v729, 0.0
        %v746 = vmax.f32 %v730, 0.0
        %v747 = vmax.f32 %v731, 0.0
        %v748 = vmax.f32 %v732, 0.0
        %v749 = vmax.f32 %v733, 0.0
        %v750 = vmax.f32 %v734, 0.0
        %v751 = vmax.f32 %v735, 0.0
        %v752 = vmax.f32 %v736, 0.0
        %v753 = vmax.f32 %v737, 0.0
        %v754 = vmax.f32 %v738, 0.0
        %v755 = vmax.f32 %v739, 0.0
        %v756 = vmax.f32 %v740, 0.0
        %v757 = vpack.c.bf16 %v742, %v741
        %v758 = vpack.c.bf16 %v744, %v743
        %v759 = vpack.c.bf16 %v746, %v745
        %v760 = vpack.c.bf16 %v748, %v747
        %v761 = vpack.c.bf16 %v750, %v749
        %v762 = vpack.c.bf16 %v752, %v751
        %v763 = vpack.c.bf16 %v754, %v753
        %v764 = vpack.c.bf16 %v756, %v755
        %v765 = vld [vmem:[%s5] sm:$0xf]
        %v766 = vld [vmem:[%s5 + $0x4] sm:$0xf]
        %v767 = vld [vmem:[%s5 + $0x8] sm:$0xf]
        %v768 = vld [vmem:[%s5 + $0xc] sm:$0xf]
        %v769 = vld [vmem:[%s5 + $0x10] sm:$0xf]
        %v770 = vld [vmem:[%s5 + $0x14] sm:$0xf]
        %v771 = vld [vmem:[%s5 + $0x18] sm:$0xf]
        %v772 = vld [vmem:[%s5 + $0x1c] sm:$0xf]
        %v773 = vld [vmem:[%s5 + $0x20] sm:$0xf]
        %v774 = vld [vmem:[%s5 + $0x24] sm:$0xf]
        %v775 = vld [vmem:[%s5 + $0x28] sm:$0xf]
        %v776 = vld [vmem:[%s5 + $0x2c] sm:$0xf]
        %v777 = vld [vmem:[%s5 + $0x30] sm:$0xf]
        %v778 = vld [vmem:[%s5 + $0x34] sm:$0xf]
        %v779 = vld [vmem:[%s5 + $0x38] sm:$0xf]
        %v780 = vld [vmem:[%s5 + $0x3c] sm:$0xf]
        %v781 = vld [vmem:[%s6] sm:$0x1]
        %v783 = vlaneseq
        %v784 = vshrl.u32 %v783, 7
        %v785 = vsub.s32 0, %v784
        %v786 = vrot.slane %v781, %v785
        %v804 = vunpack.c.l.b16 %v765
        %v805 = vunpack.c.l.b16 %v766
        %v806 = vunpack.c.l.b16 %v767
        %v807 = vunpack.c.l.b16 %v768
        %v808 = vunpack.c.l.b16 %v769
        %v809 = vunpack.c.l.b16 %v770
        %v810 = vunpack.c.l.b16 %v771
        %v811 = vunpack.c.l.b16 %v772
        %v812 = vunpack.c.l.b16 %v773
        %v813 = vunpack.c.l.b16 %v774
        %v814 = vunpack.c.l.b16 %v775
        %v815 = vunpack.c.l.b16 %v776
        %v816 = vunpack.c.l.b16 %v777
        %v817 = vunpack.c.l.b16 %v778
        %v818 = vunpack.c.l.b16 %v779
        %v819 = vunpack.c.l.b16 %v780
        %v820 = vpack.c.b16 %v805, %v804
        %v821 = vpack.c.b16 %v807, %v806
        %v822 = vpack.c.b16 %v809, %v808
        %v823 = vpack.c.b16 %v811, %v810
        %v824 = vpack.c.b16 %v813, %v812
        %v825 = vpack.c.b16 %v815, %v814
        %v826 = vpack.c.b16 %v817, %v816
        %v827 = vpack.c.b16 %v819, %v818
        %836 = vmatprep.subr.bf16.mxu0 0
        %837 = vmatpush1.bf16.msra.mxu0 %v820
        %838 = vmatprep.subr.bf16.mxu0 0
        %839 = vmatpush1.bf16.msra.mxu0 %v821
        %840 = vmatprep.subr.bf16.mxu0 0
        %841 = vmatpush1.bf16.msra.mxu0 %v822
        %842 = vmatprep.subr.bf16.mxu0 0
        %843 = vmatpush1.bf16.msra.mxu0 %v823
        %844 = vmatprep.subr.bf16.mxu0 0
        %845 = vmatpush1.bf16.msra.mxu0 %v824
        %846 = vmatprep.subr.bf16.mxu0 0
        %847 = vmatpush1.bf16.msra.mxu0 %v825
        %848 = vmatprep.subr.bf16.mxu0 0
        %849 = vmatpush1.bf16.msra.mxu0 %v826
        %850 = vmatprep.subr.bf16.mxu0 0
        %851 = vmatpush1.bf16.msra.mxu0 %v827
        %852 = vmatprep.subr.bf16.mxu0 0
        %853 = vmatpush1.bf16.msra.mxu0 0
        %854 = vmatprep.subr.bf16.mxu0 0
        %855 = vmatpush1.bf16.msra.mxu0 0
        %856 = vmatprep.subr.bf16.mxu0 0
        %857 = vmatpush1.bf16.msra.mxu0 0
        %858 = vmatprep.subr.bf16.mxu0 0
        %859 = vmatpush1.bf16.msra.mxu0 0
        %860 = vmatprep.subr.bf16.mxu0 0
        %861 = vmatpush1.bf16.msra.mxu0 0
        %862 = vmatprep.subr.bf16.mxu0 0
        %863 = vmatpush1.bf16.msra.mxu0 0
        %864 = vmatprep.subr.bf16.mxu0 0
        %865 = vmatpush1.bf16.msra.mxu0 0
        %866 = vmatprep.subr.bf16.mxu0 0
        %867 = vmatpush1.bf16.msra.mxu0 0
        %868 = vmatprep.mubr.bf16.mxu0 0
        %869 = vmatmul.mubr.bf16.gmra.mrb[0].mxu0 %v757
        %v870 = vpop.f32.mrb[0].mxu0
        %v871 = vadd.f32 %v786, %v870
        %v872 = vpop.f32.mrb[0].mxu0
        %v873 = vpop.f32.mrb[0].mxu0
        %v874 = vadd.f32 %v786, %v873
        %v875 = vpop.f32.mrb[0].mxu0
        %876 = vmatprep.mubr.bf16.mxu0 0
        %877 = vmatmul.mubr.bf16.gmra.mrb[0].mxu0 %v758
        %v878 = vpop.f32.mrb[0].mxu0
        %v879 = vadd.f32 %v786, %v878
        %v880 = vpop.f32.mrb[0].mxu0
        %v881 = vpop.f32.mrb[0].mxu0
        %v882 = vadd.f32 %v786, %v881
        %v883 = vpop.f32.mrb[0].mxu0
        %884 = vmatprep.mubr.bf16.mxu0 0
        %885 = vmatmul.mubr.bf16.gmra.mrb[0].mxu0 %v759
        %v886 = vpop.f32.mrb[0].mxu0
        %v887 = vadd.f32 %v786, %v886
        %v888 = vpop.f32.mrb[0].mxu0
        %v889 = vpop.f32.mrb[0].mxu0
        %v890 = vadd.f32 %v786, %v889
        %v891 = vpop.f32.mrb[0].mxu0
        %892 = vmatprep.mubr.bf16.mxu0 0
        %893 = vmatmul.mubr.bf16.gmra.mrb[0].mxu0 %v760
        %v894 = vpop.f32.mrb[0].mxu0
        %v895 = vadd.f32 %v786, %v894
        %v896 = vpop.f32.mrb[0].mxu0
        %v897 = vpop.f32.mrb[0].mxu0
        %v898 = vadd.f32 %v786, %v897
        %v899 = vpop.f32.mrb[0].mxu0
        %900 = vmatprep.mubr.bf16.mxu0 0
        %901 = vmatmul.mubr.bf16.gmra.mrb[0].mxu0 %v761
        %v902 = vpop.f32.mrb[0].mxu0
        %v903 = vadd.f32 %v786, %v902
        %v904 = vpop.f32.mrb[0].mxu0
        %v905 = vpop.f32.mrb[0].mxu0
        %v906 = vadd.f32 %v786, %v905
        %v907 = vpop.f32.mrb[0].mxu0
        %908 = vmatprep.mubr.bf16.mxu0 0
        %909 = vmatmul.mubr.bf16.gmra.mrb[0].mxu0 %v762
        %v910 = vpop.f32.mrb[0].mxu0
        %v911 = vadd.f32 %v786, %v910
        %v912 = vpop.f32.mrb[0].mxu0
        %v913 = vpop.f32.mrb[0].mxu0
        %v914 = vadd.f32 %v786, %v913
        %v915 = vpop.f32.mrb[0].mxu0
        %916 = vmatprep.mubr.bf16.mxu0 0
        %917 = vmatmul.mubr.bf16.gmra.mrb[0].mxu0 %v763
        %v918 = vpop.f32.mrb[0].mxu0
        %v919 = vadd.f32 %v786, %v918
        %v920 = vpop.f32.mrb[0].mxu0
        %v921 = vpop.f32.mrb[0].mxu0
        %v922 = vadd.f32 %v786, %v921
        %v923 = vpop.f32.mrb[0].mxu0
        %924 = vmatprep.mubr.bf16.mxu0 0
        %925 = vmatmul.mubr.bf16.gmra.mrb[0].mxu0 %v764
        %v926 = vpop.f32.mrb[0].mxu0
        %v927 = vadd.f32 %v786, %v926
        %v928 = vpop.f32.mrb[0].mxu0
        %v929 = vpop.f32.mrb[0].mxu0
        %v930 = vadd.f32 %v786, %v929
        %v931 = vpop.f32.mrb[0].mxu0
        %932 = vdwg.mxu0
        %v933 = vmax.f32 %v871, 0.0
        %v934 = vmax.f32 %v874, 0.0
        %v935 = vmax.f32 %v879, 0.0
        %v936 = vmax.f32 %v882, 0.0
        %v937 = vmax.f32 %v887, 0.0
        %v938 = vmax.f32 %v890, 0.0
        %v939 = vmax.f32 %v895, 0.0
        %v940 = vmax.f32 %v898, 0.0
        %v941 = vmax.f32 %v903, 0.0
        %v942 = vmax.f32 %v906, 0.0
        %v943 = vmax.f32 %v911, 0.0
        %v944 = vmax.f32 %v914, 0.0
        %v945 = vmax.f32 %v919, 0.0
        %v946 = vmax.f32 %v922, 0.0
        %v947 = vmax.f32 %v927, 0.0
        %v948 = vmax.f32 %v930, 0.0
        %v949 = vadd.f32 %v741, %v933
        %v950 = vadd.f32 %v742, %v934
        %v951 = vadd.f32 %v743, %v935
        %v952 = vadd.f32 %v744, %v936
        %v953 = vadd.f32 %v745, %v937
        %v954 = vadd.f32 %v746, %v938
        %v955 = vadd.f32 %v747, %v939
        %v956 = vadd.f32 %v748, %v940
        %v957 = vadd.f32 %v749, %v941
        %v958 = vadd.f32 %v750, %v942
        %v959 = vadd.f32 %v751, %v943
        %v960 = vadd.f32 %v752, %v944
        %v961 = vadd.f32 %v753, %v945
        %v962 = vadd.f32 %v754, %v946
        %v963 = vadd.f32 %v755, %v947
        %v964 = vadd.f32 %v756, %v948
        %v965 = vpack.c.bf16 %v950, %v949
        %v966 = vpack.c.bf16 %v952, %v951
        %v967 = vpack.c.bf16 %v954, %v953
        %v968 = vpack.c.bf16 %v956, %v955
        %v969 = vpack.c.bf16 %v958, %v957
        %v970 = vpack.c.bf16 %v960, %v959
        %v971 = vpack.c.bf16 %v962, %v961
        %v972 = vpack.c.bf16 %v964, %v963
        %v973 = vld [vmem:[%s7] sm:$0xf]
        %v974 = vld [vmem:[%s7 + $0x4] sm:$0xf]
        %v975 = vld [vmem:[%s7 + $0x8] sm:$0xf]
        %v976 = vld [vmem:[%s7 + $0xc] sm:$0xf]
        %v977 = vld [vmem:[%s7 + $0x10] sm:$0xf]
        %v978 = vld [vmem:[%s7 + $0x14] sm:$0xf]
        %v979 = vld [vmem:[%s7 + $0x18] sm:$0xf]
        %v980 = vld [vmem:[%s7 + $0x1c] sm:$0xf]
        %v981 = vld [vmem:[%s7 + $0x20] sm:$0xf]
        %v982 = vld [vmem:[%s7 + $0x24] sm:$0xf]
        %v983 = vld [vmem:[%s7 + $0x28] sm:$0xf]
        %v984 = vld [vmem:[%s7 + $0x2c] sm:$0xf]
        %v985 = vld [vmem:[%s7 + $0x30] sm:$0xf]
        %v986 = vld [vmem:[%s7 + $0x34] sm:$0xf]
        %v987 = vld [vmem:[%s7 + $0x38] sm:$0xf]
        %v988 = vld [vmem:[%s7 + $0x3c] sm:$0xf]
        %v989 = vld [vmem:[%s8] sm:$0x1]
        %v991 = vlaneseq
        %v992 = vshrl.u32 %v991, 7
        %v993 = vsub.s32 0, %v992
        %v994 = vrot.slane %v989, %v993
        %v1012 = vunpack.c.l.b16 %v973
        %v1013 = vunpack.c.l.b16 %v974
        %v1014 = vunpack.c.l.b16 %v975
        %v1015 = vunpack.c.l.b16 %v976
        %v1016 = vunpack.c.l.b16 %v977
        %v1017 = vunpack.c.l.b16 %v978
        %v1018 = vunpack.c.l.b16 %v979
        %v1019 = vunpack.c.l.b16 %v980
        %v1020 = vunpack.c.l.b16 %v981
        %v1021 = vunpack.c.l.b16 %v982
        %v1022 = vunpack.c.l.b16 %v983
        %v1023 = vunpack.c.l.b16 %v984
        %v1024 = vunpack.c.l.b16 %v985
        %v1025 = vunpack.c.l.b16 %v986
        %v1026 = vunpack.c.l.b16 %v987
        %v1027 = vunpack.c.l.b16 %v988
        %v1028 = vpack.c.b16 %v1013, %v1012
        %v1029 = vpack.c.b16 %v1015, %v1014
        %v1030 = vpack.c.b16 %v1017, %v1016
        %v1031 = vpack.c.b16 %v1019, %v1018
        %v1032 = vpack.c.b16 %v1021, %v1020
        %v1033 = vpack.c.b16 %v1023, %v1022
        %v1034 = vpack.c.b16 %v1025, %v1024
        %v1035 = vpack.c.b16 %v1027, %v1026
        %1044 = vmatprep.subr.bf16.mxu0 0
        %1045 = vmatpush1.bf16.msra.mxu0 %v1028
        %1046 = vmatprep.subr.bf16.mxu0 0
        %1047 = vmatpush1.bf16.msra.mxu0 %v1029
        %1048 = vmatprep.subr.bf16.mxu0 0
        %1049 = vmatpush1.bf16.msra.mxu0 %v1030
        %1050 = vmatprep.subr.bf16.mxu0 0
        %1051 = vmatpush1.bf16.msra.mxu0 %v1031
        %1052 = vmatprep.subr.bf16.mxu0 0
        %1053 = vmatpush1.bf16.msra.mxu0 %v1032
        %1054 = vmatprep.subr.bf16.mxu0 0
        %1055 = vmatpush1.bf16.msra.mxu0 %v1033
        %1056 = vmatprep.subr.bf16.mxu0 0
        %1057 = vmatpush1.bf16.msra.mxu0 %v1034
        %1058 = vmatprep.subr.bf16.mxu0 0
        %1059 = vmatpush1.bf16.msra.mxu0 %v1035
        %1060 = vmatprep.subr.bf16.mxu0 0
        %1061 = vmatpush1.bf16.msra.mxu0 0
        %1062 = vmatprep.subr.bf16.mxu0 0
        %1063 = vmatpush1.bf16.msra.mxu0 0
        %1064 = vmatprep.subr.bf16.mxu0 0
        %1065 = vmatpush1.bf16.msra.mxu0 0
        %1066 = vmatprep.subr.bf16.mxu0 0
        %1067 = vmatpush1.bf16.msra.mxu0 0
        %1068 = vmatprep.subr.bf16.mxu0 0
        %1069 = vmatpush1.bf16.msra.mxu0 0
        %1070 = vmatprep.subr.bf16.mxu0 0
        %1071 = vmatpush1.bf16.msra.mxu0 0
        %1072 = vmatprep.subr.bf16.mxu0 0
        %1073 = vmatpush1.bf16.msra.mxu0 0
        %1074 = vmatprep.subr.bf16.mxu0 0
        %1075 = vmatpush1.bf16.msra.mxu0 0
        %1076 = vmatprep.mubr.bf16.mxu0 0
        %1077 = vmatmul.mubr.bf16.gmra.mrb[0].mxu0 %v965
        %v1078 = vpop.f32.mrb[0].mxu0
        %v1079 = vadd.f32 %v994, %v1078
        %v1080 = vpop.f32.mrb[0].mxu0
        %v1081 = vpop.f32.mrb[0].mxu0
        %v1082 = vadd.f32 %v994, %v1081
        %v1083 = vpop.f32.mrb[0].mxu0
        %1084 = vmatprep.mubr.bf16.mxu0 0
        %1085 = vmatmul.mubr.bf16.gmra.mrb[0].mxu0 %v966
        %v1086 = vpop.f32.mrb[0].mxu0
        %v1087 = vadd.f32 %v994, %v1086
        %v1088 = vpop.f32.mrb[0].mxu0
        %v1089 = vpop.f32.mrb[0].mxu0
        %v1090 = vadd.f32 %v994, %v1089
        %v1091 = vpop.f32.mrb[0].mxu0
        %1092 = vmatprep.mubr.bf16.mxu0 0
        %1093 = vmatmul.mubr.bf16.gmra.mrb[0].mxu0 %v967
        %v1094 = vpop.f32.mrb[0].mxu0
        %v1095 = vadd.f32 %v994, %v1094
        %v1096 = vpop.f32.mrb[0].mxu0
        %v1097 = vpop.f32.mrb[0].mxu0
        %v1098 = vadd.f32 %v994, %v1097
        %v1099 = vpop.f32.mrb[0].mxu0
        %1100 = vmatprep.mubr.bf16.mxu0 0
        %1101 = vmatmul.mubr.bf16.gmra.mrb[0].mxu0 %v968
        %v1102 = vpop.f32.mrb[0].mxu0
        %v1103 = vadd.f32 %v994, %v1102
        %v1104 = vpop.f32.mrb[0].mxu0
        %v1105 = vpop.f32.mrb[0].mxu0
        %v1106 = vadd.f32 %v994, %v1105
        %v1107 = vpop.f32.mrb[0].mxu0
        %1108 = vmatprep.mubr.bf16.mxu0 0
        %1109 = vmatmul.mubr.bf16.gmra.mrb[0].mxu0 %v969
        %v1110 = vpop.f32.mrb[0].mxu0
        %v1111 = vadd.f32 %v994, %v1110
        %v1112 = vpop.f32.mrb[0].mxu0
        %v1113 = vpop.f32.mrb[0].mxu0
        %v1114 = vadd.f32 %v994, %v1113
        %v1115 = vpop.f32.mrb[0].mxu0
        %1116 = vmatprep.mubr.bf16.mxu0 0
        %1117 = vmatmul.mubr.bf16.gmra.mrb[0].mxu0 %v970
        %v1118 = vpop.f32.mrb[0].mxu0
        %v1119 = vadd.f32 %v994, %v1118
        %v1120 = vpop.f32.mrb[0].mxu0
        %v1121 = vpop.f32.mrb[0].mxu0
        %v1122 = vadd.f32 %v994, %v1121
        %v1123 = vpop.f32.mrb[0].mxu0
        %1124 = vmatprep.mubr.bf16.mxu0 0
        %1125 = vmatmul.mubr.bf16.gmra.mrb[0].mxu0 %v971
        %v1126 = vpop.f32.mrb[0].mxu0
        %v1127 = vadd.f32 %v994, %v1126
        %v1128 = vpop.f32.mrb[0].mxu0
        %v1129 = vpop.f32.mrb[0].mxu0
        %v1130 = vadd.f32 %v994, %v1129
        %v1131 = vpop.f32.mrb[0].mxu0
        %1132 = vmatprep.mubr.bf16.mxu0 0
        %1133 = vmatmul.mubr.bf16.gmra.mrb[0].mxu0 %v972
        %v1134 = vpop.f32.mrb[0].mxu0
        %v1135 = vadd.f32 %v994, %v1134
        %v1136 = vpop.f32.mrb[0].mxu0
        %v1137 = vpop.f32.mrb[0].mxu0
        %v1138 = vadd.f32 %v994, %v1137
        %v1139 = vpop.f32.mrb[0].mxu0
        %1140 = vdwg.mxu0
        %v1141 = vmax.f32 %v1079, 0.0
        %v1142 = vmax.f32 %v1082, 0.0
        %v1143 = vmax.f32 %v1087, 0.0
        %v1144 = vmax.f32 %v1090, 0.0
        %v1145 = vmax.f32 %v1095, 0.0
        %v1146 = vmax.f32 %v1098, 0.0
        %v1147 = vmax.f32 %v1103, 0.0
        %v1148 = vmax.f32 %v1106, 0.0
        %v1149 = vmax.f32 %v1111, 0.0
        %v1150 = vmax.f32 %v1114, 0.0
        %v1151 = vmax.f32 %v1119, 0.0
        %v1152 = vmax.f32 %v1122, 0.0
        %v1153 = vmax.f32 %v1127, 0.0
        %v1154 = vmax.f32 %v1130, 0.0
        %v1155 = vmax.f32 %v1135, 0.0
        %v1156 = vmax.f32 %v1138, 0.0
        %v1157 = vadd.f32 %v949, %v1141
        %v1158 = vadd.f32 %v950, %v1142
        %v1159 = vadd.f32 %v951, %v1143
        %v1160 = vadd.f32 %v952, %v1144
        %v1161 = vadd.f32 %v953, %v1145
        %v1162 = vadd.f32 %v954, %v1146
        %v1163 = vadd.f32 %v955, %v1147
        %v1164 = vadd.f32 %v956, %v1148
        %v1165 = vadd.f32 %v957, %v1149
        %v1166 = vadd.f32 %v958, %v1150
        %v1167 = vadd.f32 %v959, %v1151
        %v1168 = vadd.f32 %v960, %v1152
        %v1169 = vadd.f32 %v961, %v1153
        %v1170 = vadd.f32 %v962, %v1154
        %v1171 = vadd.f32 %v963, %v1155
        %v1172 = vadd.f32 %v964, %v1156
        %v1173 = vld [vmem:[%s9] sm:$0x1]
        %v1174 = vpack.c.bf16 %v1158, %v1157
        %v1175 = vpack.c.bf16 %v1160, %v1159
        %v1176 = vpack.c.bf16 %v1162, %v1161
        %v1177 = vpack.c.bf16 %v1164, %v1163
        %v1178 = vpack.c.bf16 %v1166, %v1165
        %v1179 = vpack.c.bf16 %v1168, %v1167
        %v1180 = vpack.c.bf16 %v1170, %v1169
        %v1181 = vpack.c.bf16 %v1172, %v1171
        %v1182 = vld [vmem:[#allocation2] sm:$0x1]
        %1184 = vset.pattern.permute.xlu0 0
        %1185 = vperm.xlu0 %1184, %v1182
        %v1186 = vpop.permute.xlu0 %1185
        %v1188 = vlaneseq
        %v1189 = vshrl.u32 %v1188, 7
        %v1190 = vsub.s32 0, %v1189
        %v1191 = vrot.slane %v1186, %v1190
        %1192 = vmatprep.subr.bf16.mxu0 0
        %1193 = vmatpush1.bf16.xpose.msra.mxu0 %v1174
        %1194 = vmatprep.subr.bf16.mxu0 0
        %1195 = vmatpush1.bf16.xpose.msra.mxu0 %v1175
        %1196 = vmatprep.subr.bf16.mxu0 0
        %1197 = vmatpush1.bf16.xpose.msra.mxu0 %v1176
        %1198 = vmatprep.subr.bf16.mxu0 0
        %1199 = vmatpush1.bf16.xpose.msra.mxu0 %v1177
        %1200 = vmatprep.subr.bf16.mxu0 0
        %1201 = vmatpush1.bf16.xpose.msra.mxu0 %v1178
        %1202 = vmatprep.subr.bf16.mxu0 0
        %1203 = vmatpush1.bf16.xpose.msra.mxu0 %v1179
        %1204 = vmatprep.subr.bf16.mxu0 0
        %1205 = vmatpush1.bf16.xpose.msra.mxu0 %v1180
        %1206 = vmatprep.subr.bf16.mxu0 0
        %1207 = vmatpush1.bf16.xpose.msra.mxu0 %v1181
        %1208 = vmatprep.subr.bf16.mxu0 0
        %1209 = vmatpush1.bf16.xpose.msra.mxu0 0
        %1210 = vmatprep.subr.bf16.mxu0 0
        %1211 = vmatpush1.bf16.xpose.msra.mxu0 0
        %1212 = vmatprep.subr.bf16.mxu0 0
        %1213 = vmatpush1.bf16.xpose.msra.mxu0 0
        %1214 = vmatprep.subr.bf16.mxu0 0
        %1215 = vmatpush1.bf16.xpose.msra.mxu0 0
        %1216 = vmatprep.subr.bf16.mxu0 0
        %1217 = vmatpush1.bf16.xpose.msra.mxu0 0
        %1218 = vmatprep.subr.bf16.mxu0 0
        %1219 = vmatpush1.bf16.xpose.msra.mxu0 0
        %1220 = vmatprep.subr.bf16.mxu0 0
        %1221 = vmatpush1.bf16.xpose.msra.mxu0 0
        %1222 = vmatprep.subr.bf16.mxu0 0
        %1223 = vmatpush1.bf16.xpose.msra.mxu0 0
        %1224 = vmatprep.mubr.bf16.mxu0 0
        %1225 = vmatmul.mubr.bf16.gmra.mrb[0].mxu0 %v1173
        %v1226 = vpop.f32.mrb[0].mxu0
        %v1227 = vadd.f32 %v1191, %v1226
        %v1228 = vpop.f32.mrb[0].mxu0
        %v1229 = vpop.f32.mrb[0].mxu0
        %v1230 = vpop.f32.mrb[0].mxu0
        %1231 = vdwg.mxu0
        %1232 = vst [vmem:[%s397] sm:$0x1] %v1227
        %s1233 = sand.u32 %s276, 1
        %s1234 = scalar_lea.sflag [#allocation4], %s1233
        %s1235 = sand.u32 %s276, 1
        %s1236 = scalar_lea.vmem [#allocation3], %s1235
        // Predicated region
        $region65: #{altnet_forward.1} parent=63 // pred_check
          %p1237 = pneg %p286
        $region66: #{altnet_forward.1} parent=63 // pred_check_branch
          %1239 = sbr.rel (%p1237) target = $region68
        $region67: #{altnet_forward.1} parent=63 // pred_region
          %s1241 = ssub.s32 16, 16
          %1242 = vsyncadd %s1234, %s1241
          %s1243 = smul.addr %s27, 16
          %s1244 = scalar_lea.hbm %s11, %s1243
          %s1246 = sshll.u32 %s1236, 4
          %s1247 = int_to_ptr.vmem [resolvable:$true] %s1246
          %1249 = dma.vmem_to_hbm [thread:$0]  %s1247, 16, %s1244, %s1234
        $region68: #{altnet_forward.1} parent=63 // pred_fallthru
          _
      $region64: #{altnet_forward.1} parent=5 // pred_fallthru
        _
      %p1250 = scmp.le.s32.totalorder 2, %s22
      // Predicated region
      $region69: #{altnet_forward.1} parent=5 // pred_check
        %p1251 = pneg %p1250
      $region70: #{altnet_forward.1} parent=5 // pred_check_branch
        %1253 = sbr.rel (%p1251) target = $region72
      $region71: #{altnet_forward.1} parent=5 // pred_region
        %s1254 = ssub.s32 %s22, 2
        // Predicated region
        $region73: #{altnet_forward.1} parent=71 // pred_check
          %p1255 = pneg %p292
        $region74: #{altnet_forward.1} parent=71 // pred_check_branch
          %1257 = sbr.rel (%p1255) target = $region76
        $region75: #{altnet_forward.1} parent=71 // pred_region
          %s1258 = sand.u32 %s277, 1
          %s1259 = scalar_lea.sflag [#allocation4], %s1258
          %s1260 = sand.u32 %s277, 1
          %s1261 = scalar_lea.vmem [#allocation3], %s1260
          %1262 = dma.done %s1259, 16
        $region76: #{altnet_forward.1} parent=71 // pred_fallthru
          _
      $region72: #{altnet_forward.1} parent=5 // pred_fallthru
        _
    $region6: #{altnet_forward.1} parent=1 // loop_footer
      %s26 = sadd.s32 1, %s22
    $region7: #{altnet_forward.1} parent=1 // loop_footer_branch
      %21 = sbr.rel target = $region3
    $region8: #{altnet_forward.1} parent=1 // loop_exit
      _
    %1263 = vsyncpa [#allocation4], 1
    %s1264 = scalar_lea.sflag [#allocation4], 1
    %1265 = vsyncpa %s1264, 1

</llo_original>
